<compile_context>
chip_gen: v7x
topology: tpu7x:2x2x1
jax: 0.10.0
libtpu: 0.0.40
codegen_flags: <defaults>
</compile_context>

<pallas_src>
import functools

import jax
import jax.numpy as jnp
from jax.experimental import pallas as pl
from jax.experimental.pallas import tpu as pltpu


def _round_up(n, m):
    return -(-n // m) * m


# --------------------------------------------------------------------------- #
# Kernel
# --------------------------------------------------------------------------- #
def _temporal_head_kernel(x_ref, o_ref, acc_ref, *, inv_hw, hw, hw_tile, mask_hw):
    """One grid step.

    x_ref:   (b_tile, d_tile, t, hw_tile)   input tile (VMEM)
    o_ref:   (b_tile, t, d_tile)            output tile (resident across hw axis)
    acc_ref: (b_tile, t, d_tile) f32        accumulator scratch
    Grid: (batch tiles, channel tiles, hw tiles); hw is the "arbitrary" reduction axis.
    """
    k = pl.program_id(2)

    @pl.when(k == 0)
    def _init():
        acc_ref[...] = jnp.zeros_like(acc_ref)

    x = x_ref[...].astype(jnp.float32)          # f32 accumulation (v5e-safe)
    if mask_hw:
        # Last hw block is partial: zero the out-of-bounds lanes (their content is
        # undefined padding) before reducing.  The iota is only (1,1,1,hw_tile).
        lane = jax.lax.broadcasted_iota(jnp.int32, (1, 1, 1, hw_tile), 3)
        x = jnp.where(lane < (hw - k * hw_tile), x, 0.0)

    # Spatial partial sum, then the tiny (d, t) -> (t, d) transpose; both run on the
    # otherwise-idle XLU slots of this HBM-bandwidth-bound kernel.
    acc_ref[...] += jnp.transpose(jnp.sum(x, axis=-1), (0, 2, 1))

    @pl.when(k == pl.num_programs(2) - 1)
    def _finalize():
        o_ref[...] = (acc_ref[...] * inv_hw).astype(o_ref.dtype)


# --------------------------------------------------------------------------- #
# Tile selection & VMEM accounting
# --------------------------------------------------------------------------- #
def _choose_tiles(b, d, t, hw, itemsize, target_hbm, vmem_cap):
    """Pick (b_tile, d_tile, hw_tile).

    Legality ((8, 128) rule on the last two block dims):
      * input block (b_tile, d_tile, t, hw_tile): t always full; hw_tile is a
        multiple of 128 or the full hw.
      * output block (b_tile, t, d_tile): d_tile is a multiple of 128 (lane-dense,
        unmasked vst) or the full d.
    Targets: ~target_hbm bytes of real HBM input per grid step while the padded
    VMEM input block stays <= vmem_cap (double-buffered by the Pallas pipeline).
    """
    sub = max(8, 32 // itemsize)            # sublane: 8 f32, 16 bf16, 32 int8/fp8
    t_pad = _round_up(t, sub)

    def vmem(d_tile, hw_tile):              # padded VMEM bytes of one input block
        return d_tile * t_pad * _round_up(min(hw_tile, hw), 128) * itemsize

    def hbm(d_tile, hw_tile):               # real HBM bytes read per block
        return d_tile * t * min(hw_tile, hw) * itemsize

    # Channel tile: full d when a single 128-lane hw slice of it fits the budgets
    # (or d cannot legally be split below 128); otherwise a multiple of 128.
    if d <= 128 or (vmem(d, 128) <= vmem_cap and hbm(d, 128) <= target_hbm):
        d_tile = d
    else:
        k = max(1, min(vmem_cap // max(1, vmem(128, 128)),
                       target_hbm // max(1, hbm(128, 128))))
        d_tile = min(d, int(k) * 128)

    # Spatial tile: full hw if it fits, else a multiple of 128 (reduced over the
    # innermost "arbitrary" grid axis into the f32 accumulator).
    if vmem(d_tile, hw) <= vmem_cap and hbm(d_tile, hw) <= target_hbm:
        hw_tile = hw
    else:
        k = max(1, min(vmem_cap // max(1, vmem(d_tile, 128)),
                       target_hbm // max(1, hbm(d_tile, 128))))
        hw_tile = min(hw, int(k) * 128)

    # Batch tile: pack batch elements only when one full (d, hw) slab is far below
    # the per-step target, but keep >= ~2-4 steps on the parallel axes so both v7x
    # TensorCores get work and the pipeline has something to overlap.
    b_tile = 1
    if d_tile == d and hw_tile == hw:
        by_budget = max(1, min(vmem_cap // max(1, vmem(d, hw)),
                               target_hbm // max(1, hbm(d, hw))))
        b_tile = int(max(1, min(b, by_budget, max(1, b // 4))))
    return b_tile, d_tile, hw_tile


def _vmem_needed(b_tile, d_tile, hw_tile, t, hw, itemsize, is_f32):
    """Conservative working-set estimate, including in-kernel temporaries."""
    sub = max(8, 32 // itemsize)
    lanes = _round_up(min(hw_tile, hw), 128)
    in_pad = b_tile * d_tile * _round_up(t, sub) * lanes * itemsize
    out_pad = b_tile * _round_up(t, sub) * _round_up(d_tile, 128) * itemsize
    acc_pad = b_tile * _round_up(t, 8) * _round_up(d_tile, 128) * 4
    # f32 upcast of the tile (non-f32 inputs) and the masked copy when the last hw
    # block is partial -- counted explicitly so the scoped limit is never exceeded.
    elems_pad = b_tile * d_tile * _round_up(t, 8) * lanes
    temp = 0 if is_f32 else elems_pad * 4
    if hw_tile < hw and hw % hw_tile != 0:
        temp += elems_pad * 4
    return 2 * in_pad + 2 * out_pad + acc_pad + temp + (2 << 20)


# --------------------------------------------------------------------------- #
# Wrapper
# --------------------------------------------------------------------------- #
def video_resnet_temporal_head(x):
    """x: (b, d, t, h, w) -> (b, t, d); mean over spatial (h, w), keep temporal."""
    b, d, t, h, w = x.shape
    hw = h * w
    itemsize = jnp.dtype(x.dtype).itemsize
    is_f32 = jnp.dtype(x.dtype) == jnp.dtype(jnp.float32)

    # Free contiguous reshape; puts the spatial reduction on the lane (last) dim.
    # (No wrapper transpose -- that would be a full extra HBM read+write pass.)
    xr = x.reshape(b, d, t, hw)

    b_tile, d_tile, hw_tile = _choose_tiles(
        b, d, t, hw, itemsize, target_hbm=4 << 20, vmem_cap=5 << 20)
    grid = (pl.cdiv(b, b_tile), pl.cdiv(d, d_tile), pl.cdiv(hw, hw_tile))
    mask_hw = (hw % hw_tile) != 0

    # Explicit scoped-VMEM limit when the working set exceeds the smallest default
    # (v5e: 16 MiB), capped below this generation's physical VMEM (v7x: 64 MiB per
    # core) with headroom for Mosaic internal scratch.
    needed = _vmem_needed(b_tile, d_tile, hw_tile, t, hw, itemsize, is_f32)
    try:
        phys = int(pltpu.get_tpu_info().vmem_capacity_bytes)
    except Exception:
        phys = 64 << 20                      # smallest per-core VMEM (v7x)
    cap = int(phys * 0.85)
    vmem_limit = None if needed <= (16 << 20) else int(min(cap, max(needed, 32 << 20)))

    kernel = functools.partial(
        _temporal_head_kernel,
        inv_hw=1.0 / float(hw), hw=hw, hw_tile=hw_tile, mask_hw=mask_hw)

    # Pure-bandwidth op: advise XLA so it can overlap neighboring compute.
    cost = pl.CostEstimate(
        flops=b * d * t * hw,                # the spatial-sum adds
        transcendentals=0,
        bytes_accessed=(b * d * t * hw + b * t * d) * itemsize,
    )

    return pl.pallas_call(
        kernel,
        out_shape=jax.ShapeDtypeStruct((b, t, d), x.dtype),
        grid=grid,
        in_specs=[
            # Last two block dims (t, hw_tile): t equals the full dim; hw_tile is a
            # multiple of 128 or the full hw, satisfying the (8, 128) constraint.
            pl.BlockSpec((b_tile, d_tile, t, hw_tile), lambda i, j, k: (i, j, 0, k)),
        ],
        # Output block index is constant along the hw axis -> resident accumulator
        # target; last dim d_tile is 128-aligned or the full d -> lane-dense stores.
        out_specs=pl.BlockSpec((b_tile, t, d_tile), lambda i, j, k: (i, 0, j)),
        scratch_shapes=[pltpu.VMEM((b_tile, t, d_tile), jnp.float32)],
        compiler_params=pltpu.CompilerParams(
            dimension_semantics=("parallel", "parallel", "arbitrary"),
            vmem_limit_bytes=vmem_limit,
        ),
        cost_estimate=cost,
    )(xr)


if __name__ == "__main__":
    key = jax.random.PRNGKey(0)
    b, d, t, h, w = 2, 4, 8, 16, 16
    x = jax.random.normal(key, (b, d, t, h, w), dtype=jnp.float32)

    out = video_resnet_temporal_head(x)
    out = jax.block_until_ready(out)

    # Pure-JAX reference: mean over (h, w), then (b, d, t) -> (b, t, d).
    ref = jnp.transpose(jnp.mean(x, axis=(3, 4)), (0, 2, 1))
    assert out.shape == (b, t, d), out.shape
    assert jnp.allclose(out, ref, atol=1e-5, rtol=1e-5), "mismatch vs reference"

    print("KERNEL_OK")
</pallas_src>

<mosaic_0001>
module attributes {stable_mosaic.version = 11 : i64} {
  func.func @_temporal_head_kernel(%arg0: i32, %arg1: i32, %arg2: i32, %arg3: memref<1x4x8x256xf32, #tpu.memory_space<vmem>>, %arg4: memref<1x8x4xf32, #tpu.memory_space<vmem>>, %arg5: memref<1x8x4xf32, #tpu.memory_space<vmem>>) attributes {dimension_semantics = [#tpu.dimension_semantics<parallel>, #tpu.dimension_semantics<parallel>, #tpu.dimension_semantics<arbitrary>], iteration_bounds = array<i64: 2, 1, 1>, scalar_prefetch = 0 : i64, scratch_operands = 1 : i64, tpu.core_type = #tpu.core_type<tc>, window_params = [{transform_indices = @transform_0, window_bounds = array<i64: 1, 4, 8, 256>}, {transform_indices = @transform_1, window_bounds = array<i64: 1, 8, 4>}]} {
    %c0_i32 = arith.constant 0 : i32
    %0 = arith.cmpi eq, %arg2, %c0_i32 : i32
    %1 = arith.extui %0 : i1 to i32
    %c0_i32_0 = arith.constant 0 : i32
    %2 = arith.cmpi ne, %1, %c0_i32_0 : i32
    scf.if %2 {
      %cst_12 = arith.constant 0.000000e+00 : f32
      %12 = vector.broadcast %cst_12 : f32 to vector<1x8x4xf32>
      %c0_13 = arith.constant 0 : index
      %c0_14 = arith.constant 0 : index
      %c0_15 = arith.constant 0 : index
      %13 = vector.load %arg5[%c0_13, %c0_14, %c0_15] : memref<1x8x4xf32, #tpu.memory_space<vmem>>, vector<1x8x4xf32>
      tpu.vector_store %arg5[%c0_13, %c0_14, %c0_15], %12 {strides = array<i32>} : memref<1x8x4xf32, #tpu.memory_space<vmem>>, vector<1x8x4xf32>,
    } else {
    }
    %c0 = arith.constant 0 : index
    %c0_1 = arith.constant 0 : index
    %c0_2 = arith.constant 0 : index
    %c0_3 = arith.constant 0 : index
    %3 = vector.load %arg3[%c0, %c0_1, %c0_2, %c0_3] : memref<1x4x8x256xf32, #tpu.memory_space<vmem>>, vector<1x4x8x256xf32>
    %c0_4 = arith.constant 0 : index
    %c0_5 = arith.constant 0 : index
    %c0_6 = arith.constant 0 : index
    %4 = vector.load %arg5[%c0_4, %c0_5, %c0_6] : memref<1x8x4xf32, #tpu.memory_space<vmem>>, vector<1x8x4xf32>
    %cst = arith.constant dense<0.000000e+00> : vector<1x4x8xf32>
    %5 = vector.multi_reduction <add>, %3, %cst [3] : vector<1x4x8x256xf32> to vector<1x4x8xf32>
    %6 = tpu.transpose %5, [0, 2, 1] : vector<1x4x8xf32> -> vector<1x8x4xf32>
    %7 = arith.addf %4, %6 : vector<1x8x4xf32>
    %c0_7 = arith.constant 0 : index
    %c0_8 = arith.constant 0 : index
    %c0_9 = arith.constant 0 : index
    %8 = vector.load %arg5[%c0_7, %c0_8, %c0_9] : memref<1x8x4xf32, #tpu.memory_space<vmem>>, vector<1x8x4xf32>
    tpu.vector_store %arg5[%c0_7, %c0_8, %c0_9], %7 {strides = array<i32>} : memref<1x8x4xf32, #tpu.memory_space<vmem>>, vector<1x8x4xf32>,
    %c0_i32_10 = arith.constant 0 : i32
    %9 = arith.cmpi eq, %arg2, %c0_i32_10 : i32
    %10 = arith.extui %9 : i1 to i32
    %c0_i32_11 = arith.constant 0 : i32
    %11 = arith.cmpi ne, %10, %c0_i32_11 : i32
    scf.if %11 {
      %c0_12 = arith.constant 0 : index
      %c0_13 = arith.constant 0 : index
      %c0_14 = arith.constant 0 : index
      %12 = vector.load %arg5[%c0_12, %c0_13, %c0_14] : memref<1x8x4xf32, #tpu.memory_space<vmem>>, vector<1x8x4xf32>
      %cst_15 = arith.constant 3.906250e-03 : f32
      %13 = vector.broadcast %cst_15 : f32 to vector<1x8x4xf32>
      %14 = arith.mulf %12, %13 : vector<1x8x4xf32>
      %c0_16 = arith.constant 0 : index
      %c0_17 = arith.constant 0 : index
      %c0_18 = arith.constant 0 : index
      %15 = vector.load %arg4[%c0_16, %c0_17, %c0_18] : memref<1x8x4xf32, #tpu.memory_space<vmem>>, vector<1x8x4xf32>
      tpu.vector_store %arg4[%c0_16, %c0_17, %c0_18], %14 {strides = array<i32>} : memref<1x8x4xf32, #tpu.memory_space<vmem>>, vector<1x8x4xf32>,
    } else {
    }
    return
  }
  func.func @transform_0(%arg0: i32, %arg1: i32, %arg2: i32) -> (i32, i32, i32, i32) {
    %c0_i32 = arith.constant 0 : i32
    %c0_i32_0 = arith.constant 0 : i32
    return %arg0, %arg1, %c0_i32, %arg2 : i32, i32, i32, i32
  }
  func.func @transform_1(%arg0: i32, %arg1: i32, %arg2: i32) -> (i32, i32, i32) {
    %c0_i32 = arith.constant 0 : i32
    %c0_i32_0 = arith.constant 0 : i32
    return %arg0, %c0_i32, %arg1 : i32, i32, i32
  }
}

</mosaic_0001>

<llo_original>
// kernel: tpu_custom_call.1
$region0: #{tpu_custom_call.1}
  #allocation0 [shape = 'u32[]', space=smem, size = 0x4, offset = 0x4, fixed_abs, tag = 'smem constant byte address 0x4 - core index']
  #allocation1 [shape = 'u32[144,128]{1,0:T(1,128)}', space=vmem, size = 0x12000, scoped, tag = 'internal scratch']
  #allocation2 [shape = 'f32[1,8,4]{2,1,0:T(8,128)}', space=vmem, size = 0x1000, scoped, tag = 'scratch operand']
  %s0 = inlined_call_operand.hbm [shape: f32[2,4,8,256], index: 0, kind: input, shape index: {}]
  %s1 = inlined_call_operand.vmem [shape: f32[2,8,4], index: 1, kind: output, shape index: {}]
  %s2 = sld [smem:[#allocation0]]
  $region49: #{tpu_custom_call.1} parent=0
    _
  %s4 = ssub.s32 1, %s2
  %s5 = scalar_select 0, %s4, %s2
  $region1: #{tpu_custom_call.1} parent=0
    #allocation3 [shape = 'u8[65536]{0}', space=vmem, size = 0x10000, scoped, tag = 'input window, operand 0']
    #allocation4 [shape = 's32[2]{0}', space=sflag, size = 0x8, scoped, tag = 'scoped memory for tpu_custom_call.1']
    %6 = vsyncpa [#allocation4], 0
    %s7 = scalar_lea.sflag [#allocation4], 1
    %8 = vsyncpa %s7, 0
    loop: start=0, step=1, limit=4
    $region2: #{tpu_custom_call.1} parent=1 // loop_pre_header
      _
    $region3: #{tpu_custom_call.1} parent=1 // loop_header
      %s10 = sphi 0, %s14
      %p11 = scmp.ge.s32.totalorder %s10, 4
      %s17 = sphi 0, %s36
      %s18 = sphi 0, %s32
      %s19 = sphi 0, %s28
      %s20 = sphi 0, %s17
      %s21 = sphi 0, %s18
      %s22 = sphi 0, %s19
      %s23 = sphi 0, %s20
      %s24 = sphi 0, %s21
      %s25 = sphi 0, %s22
      %s43 = sphi 0, %s45
      %s46 = sphi 0, %s43
      %s47 = sphi 0, %s46
      %s63 = sphi 0, %s47
      %s71 = sphi 0, %s73
      %s74 = sphi 0, %s71
      %s75 = sphi 0, %s74
      %s91 = sphi 0, %s75
    $region4: #{tpu_custom_call.1} parent=1 // loop_header_branch
      %13 = sbr.rel (%p11) target = $region8
    $region5: #{tpu_custom_call.1} parent=1 // loop_body
      %s15 = ssub.s32 %s10, 1
      %s16 = ssub.s32 %s10, 2
      %s26 = sadd.s32 1, %s19
      %p27 = scmp.ge.s32.totalorder %s26, 1
      %s28 = scalar_select %p27, 0, %s26
      %s29 = sadd.s32 1, %s18
      %s30 = scalar_select %p27, %s29, %s18
      %p31 = scmp.ge.s32.totalorder %s30, 1
      %s32 = scalar_select %p31, 0, %s30
      %s33 = sadd.s32 1, %s17
      %s34 = scalar_select %p31, %s33, %s17
      %p35 = scmp.ge.s32.totalorder %s34, 2
      %s36 = scalar_select %p35, 0, %s34
      %s37 = ssub.s32 %s17, %s36
      %s38 = ssub.s32 %s18, %s32
      %s39 = sor.u32 %s37, %s38
      %s40 = ssub.s32 %s19, %s28
      %s41 = sor.u32 %s39, %s40
      %p42 = scmp.eq.s32.totalorder %s41, 0
      %s44 = sadd.s32 %s43, 1
      %s45 = scalar_select %p42, %s43, %s44
      %p48 = pneg %p42
      %p49 = scmp.eq.s32.totalorder %s10, 1
      %p50 = por %p48, %p49
      %p51 = scmp.ne.s32.totalorder %s43, %s46
      %p52 = scmp.eq.s32.totalorder %s10, 0
      %p53 = por %p51, %p52
      %p54 = scmp.ne.s32.totalorder %s43, %s46
      %p55 = scmp.eq.s32.totalorder %s15, 1
      %p56 = por %p54, %p55
      %p57 = scmp.ne.s32.totalorder %s46, %s47
      %p58 = scmp.eq.s32.totalorder %s15, 0
      %p59 = por %p57, %p58
      %p60 = scmp.ne.s32.totalorder %s46, %s47
      %p61 = scmp.eq.s32.totalorder %s16, 1
      %p62 = por %p60, %p61
      %p64 = scmp.ne.s32.totalorder %s47, %s63
      %p65 = scmp.eq.s32.totalorder %s16, 0
      %p66 = por %p64, %p65
      %s67 = ssub.s32 %s17, %s36
      %s68 = ssub.s32 %s18, %s32
      %s69 = sor.u32 %s67, %s68
      %p70 = scmp.eq.s32.totalorder %s69, 0
      %s72 = sadd.s32 %s71, 1
      %s73 = scalar_select %p70, %s71, %s72
      %p76 = pneg %p70
      %p77 = scmp.eq.s32.totalorder %s10, 1
      %p78 = por %p76, %p77
      %p79 = scmp.ne.s32.totalorder %s71, %s74
      %p80 = scmp.eq.s32.totalorder %s10, 0
      %p81 = por %p79, %p80
      %p82 = scmp.ne.s32.totalorder %s71, %s74
      %p83 = scmp.eq.s32.totalorder %s15, 1
      %p84 = por %p82, %p83
      %p85 = scmp.ne.s32.totalorder %s74, %s75
      %p86 = scmp.eq.s32.totalorder %s15, 0
      %p87 = por %p85, %p86
      %p88 = scmp.ne.s32.totalorder %s74, %s75
      %p89 = scmp.eq.s32.totalorder %s16, 1
      %p90 = por %p88, %p89
      %p92 = scmp.ne.s32.totalorder %s75, %s91
      %p93 = scmp.eq.s32.totalorder %s16, 0
      %p94 = por %p92, %p93
      %p95 = scmp.le.s32.totalorder 1, %s10
      %p96 = scmp.lt.s32.totalorder %s10, 3
      %p97 = pnand %p95, %p96
      %p98 = pneg %p97
      // Predicated region
      $region9: #{tpu_custom_call.1} parent=5 // pred_check
        _
      $region10: #{tpu_custom_call.1} parent=5 // pred_check_branch
        %100 = sbr.rel (%p97) target = $region12
      $region11: #{tpu_custom_call.1} parent=5 // pred_region
        %s101 = ssub.s32 %s10, 1
      $region12: #{tpu_custom_call.1} parent=5 // pred_fallthru
        _
      %p102 = scmp.lt.s32.totalorder %s10, 2
      // Predicated region
      $region13: #{tpu_custom_call.1} parent=5 // pred_check
        %p103 = pneg %p102
      $region14: #{tpu_custom_call.1} parent=5 // pred_check_branch
        %105 = sbr.rel (%p103) target = $region16
      $region15: #{tpu_custom_call.1} parent=5 // pred_region
        // Predicated region
        $region17: #{tpu_custom_call.1} parent=15 // pred_check
          %p106 = pneg %p53
        $region18: #{tpu_custom_call.1} parent=15 // pred_check_branch
          %108 = sbr.rel (%p106) target = $region20
        $region19: #{tpu_custom_call.1} parent=15 // pred_region
          %s109 = sand.u32 %s43, 1
          %s110 = scalar_lea.sflag [#allocation4], %s109
          %s111 = sand.u32 %s43, 1
          %s112 = smul.addr %s111, 64
          %s113 = scalar_lea.vmem [#allocation3], %s112
          %s114 = smul.u32 4, %s18
          %s115 = smul.u32 2, %s19
          %s117 = ssub.s32 1024, 1024
          %118 = vsyncadd %s110, %s117
          %s119 = smul.addr %s114, 2
          %s120 = sadd.s32 %s115, %s119
          %s121 = smul.addr %s17, 8
          %s122 = sadd.s32 %s120, %s121
          %s123 = smul.addr %s122, 128
          %s124 = scalar_lea.hbm %s0, %s123
          %s125 = sshll.u32 %s113, 4
          %s126 = int_to_ptr.vmem [resolvable:$true] %s125
          %131 = dma.hbm_to_vmem [thread:$0]  %s124, 1024, %s126, %s110, 256, 256, 16
        $region20: #{tpu_custom_call.1} parent=15 // pred_fallthru
          _
      $region16: #{tpu_custom_call.1} parent=5 // pred_fallthru
        _
      %p132 = scmp.le.s32.totalorder 1, %s10
      %p133 = scmp.lt.s32.totalorder %s10, 3
      %p134 = pnand %p132, %p133
      %p135 = pneg %p134
      // Predicated region
      $region21: #{tpu_custom_call.1} parent=5 // pred_check
        _
      $region22: #{tpu_custom_call.1} parent=5 // pred_check_branch
        %137 = sbr.rel (%p134) target = $region24
      $region23: #{tpu_custom_call.1} parent=5 // pred_region
        %s138 = ssub.s32 %s10, 1
        %s139 = sand.u32 %s46, 1
        %s140 = scalar_lea.sflag [#allocation4], %s139
        %s141 = sand.u32 %s46, 1
        %s142 = smul.addr %s141, 64
        %s143 = scalar_lea.vmem [#allocation3], %s142
        // Predicated region
        $region25: #{tpu_custom_call.1} parent=23 // pred_check
          %p144 = pneg %p59
        $region26: #{tpu_custom_call.1} parent=23 // pred_check_branch
          %146 = sbr.rel (%p144) target = $region28
        $region27: #{tpu_custom_call.1} parent=23 // pred_region
          %147 = dma.done %s140, 1024
        $region28: #{tpu_custom_call.1} parent=23 // pred_fallthru
          _
        %s148 = sand.u32 %s46, 1
        %s149 = scalar_lea.sflag [#allocation4], %s148
        %s150 = sand.u32 %s46, 1
        %s151 = smul.addr %s150, 64
        %s152 = scalar_lea.vmem [#allocation3], %s151
        %p153 = pneg %p59
        %p154 = pneg %p56
        %p155 = pneg %p87
        %p156 = pneg %p84
        %p157 = scmp.lt.s32.totalorder %s20, 1
        %s158 = scalar_select %p157, %s20, 1
        %p159 = scmp.lt.s32.totalorder %s21, 0
        %s160 = scalar_select %p159, %s21, 0
        %s161 = sadd.s32 %s160, %s158
        %s162 = smul.addr %s161, 8
        %s163 = scalar_lea.vmem %s1, %s162
        %s164 = smul.u32 4, %s21
        %s165 = smul.u32 2, %s22
        %p166 = scmp.lt.s32.totalorder %s20, 1
        %s167 = scalar_select %p166, %s20, 1
        %p168 = scmp.lt.s32.totalorder %s21, 0
        %s169 = scalar_select %p168, %s21, 0
        %s170 = sadd.s32 %s169, %s167
        %s171 = smul.addr %s170, 8
        %s172 = scalar_lea.vmem %s1, %s171
        %p173 = scmp.eq.s32.totalorder %s22, 0
        // Predicated region
        $region29: #{tpu_custom_call.1} parent=23 // pred_check
          %p174 = pneg %p173
        $region30: #{tpu_custom_call.1} parent=23 // pred_check_branch
          %176 = sbr.rel (%p174) target = $region32
        $region31: #{tpu_custom_call.1} parent=23 // pred_region
          %vm177 = vcmask 31744
          %178 = vst.msk [vmem:[#allocation2] sm:$0xff] %vm177, 0.0
        $region32: #{tpu_custom_call.1} parent=23 // pred_fallthru
          _
        %v179 = vld [vmem:[%s143] sm:$0xff]
        %v180 = vld [vmem:[%s143 + $0x8] sm:$0xff]
        %v181 = vld [vmem:[%s143 + $0x10] sm:$0xff]
        %v182 = vld [vmem:[%s143 + $0x18] sm:$0xff]
        %v183 = vld [vmem:[%s143 + $0x20] sm:$0xff]
        %v184 = vld [vmem:[%s143 + $0x28] sm:$0xff]
        %v185 = vld [vmem:[%s143 + $0x30] sm:$0xff]
        %v186 = vld [vmem:[%s143 + $0x38] sm:$0xff]
        %v187 = vld [vmem:[#allocation2] sm:$0xff]
        %v188 = vadd.f32 %v179, %v180
        %189 = vadd.xlane.f32.xlu0 %v188
        %v190 = vpop.xlane.xlu0 %189
        %v191 = vadd.f32 %v181, %v182
        %192 = vadd.xlane.f32.xlu0 %v191
        %v193 = vpop.xlane.xlu0 %192
        %v194 = vadd.f32 %v183, %v184
        %195 = vadd.xlane.f32.xlu0 %v194
        %v196 = vpop.xlane.xlu0 %195
        %v197 = vadd.f32 %v185, %v186
        %198 = vadd.xlane.f32.xlu0 %v197
        %v199 = vpop.xlane.xlu0 %198
        %v204 = vlaneseq
        %v205 = vand.u32 %v204, 127
        %v206 = vlaneseq
        %v207 = vshrl.u32 %v206, 7
        %v208 = vsub.s32 %v205, %v207
        %v209 = vrot.slane %v190, %v208
        %v210 = vlaneseq
        %v211 = vshrl.u32 %v210, 7
        %v212 = vsub.s32 %v205, %v211
        %v213 = vrot.slane %v193, %v212
        %v214 = vlaneseq
        %v215 = vshrl.u32 %v214, 7
        %v216 = vsub.s32 %v205, %v215
        %v217 = vrot.slane %v196, %v216
        %v218 = vlaneseq
        %v219 = vshrl.u32 %v218, 7
        %v220 = vsub.s32 %v205, %v219
        %v221 = vrot.slane %v199, %v220
        %vm222 = vcmask 1041409
        %v223 = vsel %vm222, %v213, %v209
        %vm224 = vcmask 1042434
        %v225 = vsel %vm224, %v217, %v223
        %vm226 = vcmask 1043459
        %v227 = vsel %vm226, %v221, %v225
        %229 = vxpose.xlu0.b32.start [1/16] %v227, 128
        %230 = vxpose.xlu0.b32.cont [2/16] 0.0, 128
        %231 = vxpose.xlu0.b32.cont [3/16] 0.0, 128
        %232 = vxpose.xlu0.b32.cont [4/16] 0.0, 128
        %233 = vxpose.xlu0.b32.cont [5/16] 0.0, 128
        %234 = vxpose.xlu0.b32.cont [6/16] 0.0, 128
        %235 = vxpose.xlu0.b32.cont [7/16] 0.0, 128
        %236 = vxpose.xlu0.b32.cont [8/16] 0.0, 128
        %237 = vxpose.xlu0.b32.cont [9/16] 0.0, 128
        %238 = vxpose.xlu0.b32.cont [10/16] 0.0, 128
        %239 = vxpose.xlu0.b32.cont [11/16] 0.0, 128
        %240 = vxpose.xlu0.b32.cont [12/16] 0.0, 128
        %241 = vxpose.xlu0.b32.cont [13/16] 0.0, 128
        %242 = vxpose.xlu0.b32.cont [14/16] 0.0, 128
        %243 = vxpose.xlu0.b32.cont [15/16] 0.0, 128
        %244 = vxpose.xlu0.b32.end [16/16] 0.0, 128
        %v245 = vpop.trf.xlu0
        %v246 = vpop.trf.xlu0
        %v247 = vpop.trf.xlu0
        %v248 = vpop.trf.xlu0
        %v249 = vpop.trf.xlu0
        %v250 = vpop.trf.xlu0
        %v251 = vpop.trf.xlu0
        %v252 = vpop.trf.xlu0
        %v253 = vpop.trf.xlu0
        %v254 = vpop.trf.xlu0
        %v255 = vpop.trf.xlu0
        %v256 = vpop.trf.xlu0
        %v257 = vpop.trf.xlu0
        %v258 = vpop.trf.xlu0
        %v259 = vpop.trf.xlu0
        %v260 = vpop.trf.xlu0
        %v261 = vadd.f32 %v187, %v245
        %vm262 = vcmask 31744
        %263 = vst.msk [vmem:[#allocation2] sm:$0xff] %vm262, %v261
        // Predicated region
        $region33: #{tpu_custom_call.1} parent=23 // pred_check
          %p264 = pneg %p173
        $region34: #{tpu_custom_call.1} parent=23 // pred_check_branch
          %266 = sbr.rel (%p264) target = $region36
        $region35: #{tpu_custom_call.1} parent=23 // pred_region
          %v267 = vld [vmem:[#allocation2] sm:$0xff]
          %v268 = vmul.f32 %v267, 0.00390625
          %269 = vst.msk [vmem:[%s172] sm:$0xff] %vm262, %v268
        $region36: #{tpu_custom_call.1} parent=23 // pred_fallthru
          _
        %p270 = scmp.lt.s32.totalorder %s20, 1
        %s271 = scalar_select %p270, %s20, 1
        %p272 = scmp.lt.s32.totalorder %s21, 0
        %s273 = scalar_select %p272, %s21, 0
        %s274 = sadd.s32 %s273, %s271
        %s275 = smul.addr %s274, 8
        %s276 = scalar_lea.vmem %s1, %s275
        // Predicated region
        $region37: #{tpu_custom_call.1} parent=23 // pred_check
          %p277 = pneg %p84
        $region38: #{tpu_custom_call.1} parent=23 // pred_check_branch
          %279 = sbr.rel (%p277) target = $region40
        $region39: #{tpu_custom_call.1} parent=23 // pred_region
          _
        $region40: #{tpu_custom_call.1} parent=23 // pred_fallthru
          _
      $region24: #{tpu_custom_call.1} parent=5 // pred_fallthru
        _
      %p280 = scmp.le.s32.totalorder 2, %s10
      // Predicated region
      $region41: #{tpu_custom_call.1} parent=5 // pred_check
        %p281 = pneg %p280
      $region42: #{tpu_custom_call.1} parent=5 // pred_check_branch
        %283 = sbr.rel (%p281) target = $region44
      $region43: #{tpu_custom_call.1} parent=5 // pred_region
        %s284 = ssub.s32 %s10, 2
        // Predicated region
        $region45: #{tpu_custom_call.1} parent=43 // pred_check
          %p285 = pneg %p90
        $region46: #{tpu_custom_call.1} parent=43 // pred_check_branch
          %287 = sbr.rel (%p285) target = $region48
        $region47: #{tpu_custom_call.1} parent=43 // pred_region
          %p288 = scmp.lt.s32.totalorder %s23, 1
          %s289 = scalar_select %p288, %s23, 1
          %p290 = scmp.lt.s32.totalorder %s24, 0
          %s291 = scalar_select %p290, %s24, 0
          %s292 = sadd.s32 %s291, %s289
          %s293 = smul.addr %s292, 8
          %s294 = scalar_lea.vmem %s1, %s293
        $region48: #{tpu_custom_call.1} parent=43 // pred_fallthru
          _
      $region44: #{tpu_custom_call.1} parent=5 // pred_fallthru
        _
    $region6: #{tpu_custom_call.1} parent=1 // loop_footer
      %s14 = sadd.s32 1, %s10
    $region7: #{tpu_custom_call.1} parent=1 // loop_footer_branch
      %9 = sbr.rel target = $region3
    $region8: #{tpu_custom_call.1} parent=1 // loop_exit
      _
    %295 = vsyncpa [#allocation4], 1
    %s296 = scalar_lea.sflag [#allocation4], 1
    %297 = vsyncpa %s296, 1

</llo_original>
